<compile_context>
chip_gen: v6e
topology: v6e:2x2x1
jax: 0.10.0
libtpu: 0.0.40
codegen_flags: <defaults>
</compile_context>

<pallas_src>
import functools

import jax
import jax.numpy as jnp
from jax.experimental import pallas as pl
from jax.experimental.pallas import tpu as pltpu


def _round_up(x, m):
    return (x + m - 1) // m * m


def _separate_linear_kernel(x_ref, w_ref, b_ref, o_ref):
    # x_ref: (tn, C)  w_ref: (C, to)  b_ref: (1, to)  o_ref: (tn, to)
    acc = jnp.dot(x_ref[...], w_ref[...], preferred_element_type=jnp.float32)
    o_ref[...] = (acc + b_ref[...]).astype(o_ref.dtype)


@functools.partial(jax.jit, static_argnames=("tile_n", "tile_out", "compute_dtype"))
def separate_linear(x, w, b, *, tile_n=512, tile_out=512,
                    compute_dtype=jnp.bfloat16):
    """x: [N, C] features; w: [C, OUT] fused weights; b: [OUT] fused bias."""
    N, C = x.shape
    OUT = w.shape[1]
    out_dtype = x.dtype

    in_dt = jnp.dtype(compute_dtype)
    # bf16 sublane packing wants row tiles in multiples of 16; f32 -> 8.
    row_align = 16 if in_dt == jnp.dtype(jnp.bfloat16) else 8

    # Row tile: as large as requested but no larger than the (aligned) input.
    tn = max(row_align, min(tile_n, _round_up(N, row_align)))
    tn = _round_up(tn, row_align)
    n_pad = _round_up(N, tn)

    # Lane-dense output: pad OUT to a multiple of 128 and of the OUT tile.
    out_pad = _round_up(OUT, 128)
    to = _round_up(min(tile_out, out_pad), 128)
    out_pad = _round_up(out_pad, to)

    # Cast + pad operands (zero padding keeps the math exact on real columns).
    xc = x.astype(in_dt)
    if n_pad != N:
        xc = jnp.pad(xc, ((0, n_pad - N), (0, 0)))
    wc = w.astype(in_dt)
    bc = b.astype(jnp.float32)
    if out_pad != OUT:
        wc = jnp.pad(wc, ((0, 0), (0, out_pad - OUT)))
        bc = jnp.pad(bc, (0, out_pad - OUT))
    b2d = bc.reshape(1, out_pad)

    grid = (n_pad // tn, out_pad // to)

    dsz_in = in_dt.itemsize
    dsz_out = jnp.dtype(out_dtype).itemsize
    cost = pl.CostEstimate(
        flops=2 * n_pad * C * out_pad,
        transcendentals=0,
        bytes_accessed=(n_pad * C * dsz_in
                        + C * out_pad * dsz_in
                        + n_pad * out_pad * dsz_out),
    )

    # Per-step VMEM footprint (double-buffered x / W / bias / out).
    vmem_bytes = (2 * tn * C * dsz_in        # x tiles
                  + 2 * C * to * dsz_in      # W tiles
                  + 2 * to * 4               # bias tiles
                  + 2 * tn * to * dsz_out)   # output tiles
    vmem_limit = min(max(32 * 1024 * 1024, int(vmem_bytes * 3 // 2)),
                     100 * 1024 * 1024)

    y_pad = pl.pallas_call(
        _separate_linear_kernel,
        out_shape=jax.ShapeDtypeStruct((n_pad, out_pad), out_dtype),
        grid_spec=pltpu.PrefetchScalarGridSpec(
            num_scalar_prefetch=0,
            grid=grid,                                   # (row tiles, OUT tiles)
            in_specs=[
                # x block index is invariant along the OUT axis -> fetched once
                # per row tile even when OUT is tiled.
                pl.BlockSpec((tn, C), lambda i, j: (i, 0)),
                pl.BlockSpec((C, to), lambda i, j: (0, j)),   # fused W tile
                pl.BlockSpec((1, to), lambda i, j: (0, j)),   # fused bias tile
            ],
            out_specs=pl.BlockSpec((tn, to), lambda i, j: (i, j)),
        ),
        compiler_params=pltpu.CompilerParams(
            dimension_semantics=("parallel", "parallel"),
            vmem_limit_bytes=vmem_limit,
        ),
        cost_estimate=cost,
    )(xc, wc, b2d)

    # Strip row/lane padding.
    return y_pad[:N, :OUT]


def build_fused_params(key, in_channel, num_reg_classes, num_mixtures,
                       num_cls_classes, dtype=jnp.float32):
    """Deterministically build per-head Linear params and fuse them.

    Head order matches the PyTorch module:
      1) num_reg_classes heads of Linear(in_channel, 1, bias=True)
      2) one Linear(in_channel, nm*3, bias=True) per entry in num_mixtures
      3) one Linear(in_channel, ncls) (default bias=True) per entry in
         num_cls_classes
    """
    out_dims = (
        [1] * num_reg_classes
        + [nm * 3 for nm in num_mixtures]
        + list(num_cls_classes)
    )
    ws, bs = [], []
    for i, od in enumerate(out_dims):
        kw, kb = jax.random.split(jax.random.fold_in(key, i))
        bound = 1.0 / jnp.sqrt(in_channel)
        # torch.nn.Linear stores weight as [out, in]; we store transposed [in, out]
        ws.append(jax.random.uniform(kw, (in_channel, od), dtype,
                                     minval=-bound, maxval=bound))
        bs.append(jax.random.uniform(kb, (od,), dtype,
                                     minval=-bound, maxval=bound))
    w_fused = jnp.concatenate(ws, axis=1)   # [C, OUT_total]
    b_fused = jnp.concatenate(bs, axis=0)   # [OUT_total]
    return w_fused, b_fused, out_dims


if __name__ == "__main__":
    key = jax.random.PRNGKey(0)

    # Small, module-consistent shapes.  N deliberately NOT a multiple of the
    # tile size to exercise the remainder / padding path.
    N = 200            # number of sparse points (rows of x.F)
    in_channel = 32
    num_reg_classes = 2
    num_mixtures = [3, 4]
    num_cls_classes = [5, 7]

    kx, kp = jax.random.split(key)
    x = jax.random.normal(kx, (N, in_channel), jnp.float32)

    w_fused, b_fused, out_dims = build_fused_params(
        kp, in_channel, num_reg_classes, num_mixtures, num_cls_classes)

    y = separate_linear(x, w_fused, b_fused)
    y = jax.block_until_ready(y)

    # Reference: per-head f32 matmul then concat (mirrors the torch forward).
    refs = []
    col = 0
    for od in out_dims:
        refs.append(x @ w_fused[:, col:col + od] + b_fused[col:col + od])
        col += od
    y_ref = jnp.concatenate(refs, axis=1)

    assert y.shape == (N, sum(out_dims)), y.shape
    # bf16 inputs with f32 accumulation vs. pure-f32 reference -> loose tol.
    assert jnp.allclose(y, y_ref, atol=5e-2, rtol=5e-2), (
        float(jnp.max(jnp.abs(y - y_ref))))
    print("KERNEL_OK")
</pallas_src>

<mosaic_0001>
module attributes {stable_mosaic.version = 11 : i64} {
  func.func @_separate_linear_kernel(%arg0: i32, %arg1: i32, %arg2: memref<208x32xbf16, #tpu.memory_space<vmem>>, %arg3: memref<32x128xbf16, #tpu.memory_space<vmem>>, %arg4: memref<1x128xf32, #tpu.memory_space<vmem>>, %arg5: memref<208x128xf32, #tpu.memory_space<vmem>>) attributes {dimension_semantics = [#tpu.dimension_semantics<parallel>, #tpu.dimension_semantics<parallel>], iteration_bounds = array<i64: 1, 1>, scalar_prefetch = 0 : i64, scratch_operands = 0 : i64, tpu.core_type = #tpu.core_type<tc>, window_params = [{transform_indices = @transform_0, window_bounds = array<i64: 208, 32>}, {transform_indices = @transform_1, window_bounds = array<i64: 32, 128>}, {transform_indices = @transform_2, window_bounds = array<i64: 1, 128>}, {transform_indices = @transform_3, window_bounds = array<i64: 208, 128>}]} {
    %c0 = arith.constant 0 : index
    %c0_0 = arith.constant 0 : index
    %0 = vector.load %arg2[%c0, %c0_0] : memref<208x32xbf16, #tpu.memory_space<vmem>>, vector<208x32xbf16>
    %c0_1 = arith.constant 0 : index
    %c0_2 = arith.constant 0 : index
    %1 = vector.load %arg3[%c0_1, %c0_2] : memref<32x128xbf16, #tpu.memory_space<vmem>>, vector<32x128xbf16>
    %cst = arith.constant dense<0.000000e+00> : vector<208x128xf32>
    %2 = tpu.matmul %0, %1, %cst {dimension_numbers = #tpu.dot_dimension_numbers<[1], [0], [0], [1], [0, 0, 1, 1], [], []>} : vector<208x32xbf16>, vector<32x128xbf16>, vector<208x128xf32> -> vector<208x128xf32>
    %c0_3 = arith.constant 0 : index
    %c0_4 = arith.constant 0 : index
    %3 = vector.load %arg4[%c0_3, %c0_4] : memref<1x128xf32, #tpu.memory_space<vmem>>, vector<1x128xf32>
    %4 = vector.broadcast %3 : vector<1x128xf32> to vector<208x128xf32>
    %5 = arith.addf %2, %4 : vector<208x128xf32>
    %c0_5 = arith.constant 0 : index
    %c0_6 = arith.constant 0 : index
    %6 = vector.load %arg5[%c0_5, %c0_6] : memref<208x128xf32, #tpu.memory_space<vmem>>, vector<208x128xf32>
    tpu.vector_store %arg5[%c0_5, %c0_6], %5 {strides = array<i32>} : memref<208x128xf32, #tpu.memory_space<vmem>>, vector<208x128xf32>,
    return
  }
  func.func @transform_0(%arg0: i32, %arg1: i32) -> (i32, i32) {
    %c0_i32 = arith.constant 0 : i32
    %c0_i32_0 = arith.constant 0 : i32
    return %arg0, %c0_i32 : i32, i32
  }
  func.func @transform_1(%arg0: i32, %arg1: i32) -> (i32, i32) {
    %c0_i32 = arith.constant 0 : i32
    %c0_i32_0 = arith.constant 0 : i32
    return %c0_i32, %arg1 : i32, i32
  }
  func.func @transform_2(%arg0: i32, %arg1: i32) -> (i32, i32) {
    %c0_i32 = arith.constant 0 : i32
    %c0_i32_0 = arith.constant 0 : i32
    return %c0_i32, %arg1 : i32, i32
  }
  func.func @transform_3(%arg0: i32, %arg1: i32) -> (i32, i32) {
    %c0_i32 = arith.constant 0 : i32
    return %arg0, %arg1 : i32, i32
  }
}

</mosaic_0001>

<llo_original>
// kernel: separate_linear.1
$region0: #{separate_linear.1}
  #allocation0 [shape = 'u32[]', space=smem, size = 0x4, offset = 0x4, fixed_abs, tag = 'smem constant byte address 0x4 - core index']
  #allocation1 [shape = 'u32[144,128]{1,0:T(1,128)}', space=vmem, size = 0x12000, scoped, tag = 'internal scratch']
  %s0 = inlined_call_operand.vmem [shape: bf16[208,32], index: 0, kind: input, shape index: {}]
  %s1 = inlined_call_operand.vmem [shape: bf16[32,128], index: 1, kind: input, shape index: {}]
  %s2 = inlined_call_operand.vmem [shape: f32[1,128], index: 2, kind: input, shape index: {}]
  %s3 = inlined_call_operand.vmem [shape: f32[208,128], index: 3, kind: output, shape index: {}]
  %s4 = sld [smem:[#allocation0]]
  $region22: #{separate_linear.1} parent=0
    _
  %s6 = ssub.s32 1, %s4
  %s7 = scalar_select 0, %s6, %s4
  // Predicated region
  $region2: #{separate_linear.1} parent=0 // pred_check
    _
  $region3: #{separate_linear.1} parent=0 // pred_check_branch
    %9 = sbr.rel (0) target = $region5
  $region4: #{separate_linear.1} parent=0 // pred_region
    _
  $region5: #{separate_linear.1} parent=0 // pred_fallthru
    _
  // Predicated region
  $region6: #{separate_linear.1} parent=0 // pred_check
    _
  $region7: #{separate_linear.1} parent=0 // pred_check_branch
    %11 = sbr.rel (0) target = $region9
  $region8: #{separate_linear.1} parent=0 // pred_region
    _
  $region9: #{separate_linear.1} parent=0 // pred_fallthru
    _
  // Predicated region
  $region10: #{separate_linear.1} parent=0 // pred_check
    _
  $region11: #{separate_linear.1} parent=0 // pred_check_branch
    %13 = sbr.rel (0) target = $region13
  $region12: #{separate_linear.1} parent=0 // pred_region
    _
  $region13: #{separate_linear.1} parent=0 // pred_fallthru
    _
  %v15 = vld [vmem:[%s0] sm:$0xf]
  %v16 = vld [vmem:[%s0 + $0x4] sm:$0xf]
  %v17 = vld [vmem:[%s0 + $0x8] sm:$0xf]
  %v18 = vld [vmem:[%s0 + $0xc] sm:$0xf]
  %v19 = vld [vmem:[%s0 + $0x10] sm:$0xf]
  %v20 = vld [vmem:[%s0 + $0x14] sm:$0xf]
  %v21 = vld [vmem:[%s0 + $0x18] sm:$0xf]
  %v22 = vld [vmem:[%s0 + $0x1c] sm:$0xf]
  %v23 = vld [vmem:[%s0 + $0x20] sm:$0xf]
  %v24 = vld [vmem:[%s0 + $0x24] sm:$0xf]
  %v25 = vld [vmem:[%s0 + $0x28] sm:$0xf]
  %v26 = vld [vmem:[%s0 + $0x2c] sm:$0xf]
  %v27 = vld [vmem:[%s0 + $0x30] sm:$0xf]
  %v28 = vld [vmem:[%s0 + $0x34] sm:$0xf]
  %v29 = vld [vmem:[%s0 + $0x38] sm:$0xf]
  %v30 = vld [vmem:[%s0 + $0x3c] sm:$0xf]
  %v31 = vld [vmem:[%s0 + $0x40] sm:$0xf]
  %v32 = vld [vmem:[%s0 + $0x44] sm:$0xf]
  %v33 = vld [vmem:[%s0 + $0x48] sm:$0xf]
  %v34 = vld [vmem:[%s0 + $0x4c] sm:$0xf]
  %v35 = vld [vmem:[%s0 + $0x50] sm:$0xf]
  %v36 = vld [vmem:[%s0 + $0x54] sm:$0xf]
  %v37 = vld [vmem:[%s0 + $0x58] sm:$0xf]
  %v38 = vld [vmem:[%s0 + $0x5c] sm:$0xf]
  %v39 = vld [vmem:[%s0 + $0x60] sm:$0xf]
  %v40 = vld [vmem:[%s0 + $0x64] sm:$0xf]
  %v41 = vld [vmem:[%s1] sm:$0xf]
  %v42 = vld [vmem:[%s1 + $0x4] sm:$0xf]
  %v43 = vld [vmem:[%s1 + $0x8] sm:$0xf]
  %v44 = vld [vmem:[%s1 + $0xc] sm:$0xf]
  %v45 = vld [vmem:[%s2] sm:$0x1]
  %v47 = vlaneseq
  %v48 = vshrl.u32 %v47, 7
  %v49 = vsub.s32 0, %v48
  %v50 = vrot.slane %v45, %v49
  %v78 = vunpack.c.l.b16 %v15
  %v79 = vunpack.c.l.b16 %v16
  %v80 = vunpack.c.l.b16 %v17
  %v81 = vunpack.c.l.b16 %v18
  %v82 = vunpack.c.l.b16 %v19
  %v83 = vunpack.c.l.b16 %v20
  %v84 = vunpack.c.l.b16 %v21
  %v85 = vunpack.c.l.b16 %v22
  %v86 = vunpack.c.l.b16 %v23
  %v87 = vunpack.c.l.b16 %v24
  %v88 = vunpack.c.l.b16 %v25
  %v89 = vunpack.c.l.b16 %v26
  %v90 = vunpack.c.l.b16 %v27
  %v91 = vunpack.c.l.b16 %v28
  %v92 = vunpack.c.l.b16 %v29
  %v93 = vunpack.c.l.b16 %v30
  %v94 = vunpack.c.l.b16 %v31
  %v95 = vunpack.c.l.b16 %v32
  %v96 = vunpack.c.l.b16 %v33
  %v97 = vunpack.c.l.b16 %v34
  %v98 = vunpack.c.l.b16 %v35
  %v99 = vunpack.c.l.b16 %v36
  %v100 = vunpack.c.l.b16 %v37
  %v101 = vunpack.c.l.b16 %v38
  %v102 = vunpack.c.l.b16 %v39
  %v103 = vunpack.c.l.b16 %v40
  %v104 = vpack.c.b16 %v79, %v78
  %v105 = vpack.c.b16 %v81, %v80
  %v106 = vpack.c.b16 %v83, %v82
  %v107 = vpack.c.b16 %v85, %v84
  %v108 = vpack.c.b16 %v87, %v86
  %v109 = vpack.c.b16 %v89, %v88
  %v110 = vpack.c.b16 %v91, %v90
  %v111 = vpack.c.b16 %v93, %v92
  %v112 = vpack.c.b16 %v95, %v94
  %v113 = vpack.c.b16 %v97, %v96
  %v114 = vpack.c.b16 %v99, %v98
  %v115 = vpack.c.b16 %v101, %v100
  %v116 = vpack.c.b16 %v103, %v102
  %v121 = vunpack.c.l.b16 %v41
  %v122 = vunpack.c.l.b16 %v42
  %v123 = vunpack.c.l.b16 %v43
  %v124 = vunpack.c.l.b16 %v44
  %v125 = vpack.c.b16 %v122, %v121
  %v126 = vpack.c.b16 %v124, %v123
  %vm129 = vcmask 261120
  %v131 = vsel %vm129, %v104, 0
  %v134 = vsel %vm129, %v105, 0
  %v137 = vsel %vm129, %v106, 0
  %v140 = vsel %vm129, %v107, 0
  %v143 = vsel %vm129, %v108, 0
  %v146 = vsel %vm129, %v109, 0
  %v149 = vsel %vm129, %v110, 0
  %v152 = vsel %vm129, %v111, 0
  %v155 = vsel %vm129, %v112, 0
  %v158 = vsel %vm129, %v113, 0
  %v161 = vsel %vm129, %v114, 0
  %v164 = vsel %vm129, %v115, 0
  %v167 = vsel %vm129, %v116, 0
  %169 = vmatprep.subr.bf16.mxu0 0
  %170 = vmatpush1.bf16.msra.mxu0 0
  %171 = vmatprep.subr.bf16.mxu0 0
  %172 = vmatpush1.bf16.msra.mxu0 0
  %173 = vmatprep.subr.bf16.mxu0 0
  %174 = vmatpush1.bf16.msra.mxu0 0
  %175 = vmatprep.subr.bf16.mxu0 0
  %176 = vmatpush1.bf16.msra.mxu0 0
  %177 = vmatprep.subr.bf16.mxu0 0
  %178 = vmatpush1.bf16.msra.mxu0 0
  %179 = vmatprep.subr.bf16.mxu0 0
  %180 = vmatpush1.bf16.msra.mxu0 0
  %181 = vmatprep.subr.bf16.mxu0 0
  %182 = vmatpush1.bf16.msra.mxu0 %v126
  %183 = vmatprep.subr.bf16.mxu0 0
  %184 = vmatpush1.bf16.msra.mxu0 %v125
  %185 = vmatprep.subr.bf16.mxu0 0
  %186 = vmatpush2.bf16.msra.mxu0 0
  %187 = vmatprep.subr.bf16.mxu0 0
  %188 = vmatpush2.bf16.msra.mxu0 0
  %189 = vmatprep.subr.bf16.mxu0 0
  %190 = vmatpush2.bf16.msra.mxu0 0
  %191 = vmatprep.subr.bf16.mxu0 0
  %192 = vmatpush2.bf16.msra.mxu0 0
  %193 = vmatprep.subr.bf16.mxu0 0
  %194 = vmatpush2.bf16.msra.mxu0 0
  %195 = vmatprep.subr.bf16.mxu0 0
  %196 = vmatpush2.bf16.msra.mxu0 0
  %197 = vmatprep.subr.bf16.mxu0 0
  %198 = vmatpush2.bf16.msra.mxu0 0
  %199 = vmatprep.subr.bf16.mxu0 0
  %200 = vmatpush2.bf16.msra.mxu0 0
  %201 = vmatprep.mubr.bf16.mxu0 0
  %202 = vmatmul.mubr.bf16.gmra.mxu0 %v131
  %v203 = vpop.f32.mrf.mxu0
  %v204 = vadd.f32 %v50, %v203
  %v205 = vpop.f32.mrf.mxu0
  %v206 = vpop.f32.mrf.mxu0
  %v207 = vadd.f32 %v50, %v206
  %v208 = vpop.f32.mrf.mxu0
  %209 = vmatprep.mubr.bf16.mxu0 0
  %210 = vmatmul.mubr.bf16.gmra.mxu0 %v134
  %v211 = vpop.f32.mrf.mxu0
  %v212 = vadd.f32 %v50, %v211
  %v213 = vpop.f32.mrf.mxu0
  %v214 = vpop.f32.mrf.mxu0
  %v215 = vadd.f32 %v50, %v214
  %v216 = vpop.f32.mrf.mxu0
  %217 = vmatprep.mubr.bf16.mxu0 0
  %218 = vmatmul.mubr.bf16.gmra.mxu0 %v137
  %v219 = vpop.f32.mrf.mxu0
  %v220 = vadd.f32 %v50, %v219
  %v221 = vpop.f32.mrf.mxu0
  %v222 = vpop.f32.mrf.mxu0
  %v223 = vadd.f32 %v50, %v222
  %v224 = vpop.f32.mrf.mxu0
  %225 = vmatprep.mubr.bf16.mxu0 0
  %226 = vmatmul.mubr.bf16.gmra.mxu0 %v140
  %v227 = vpop.f32.mrf.mxu0
  %v228 = vadd.f32 %v50, %v227
  %v229 = vpop.f32.mrf.mxu0
  %v230 = vpop.f32.mrf.mxu0
  %v231 = vadd.f32 %v50, %v230
  %v232 = vpop.f32.mrf.mxu0
  %233 = vmatprep.mubr.bf16.mxu0 0
  %234 = vmatmul.mubr.bf16.gmra.mxu0 %v143
  %v235 = vpop.f32.mrf.mxu0
  %v236 = vadd.f32 %v50, %v235
  %v237 = vpop.f32.mrf.mxu0
  %v238 = vpop.f32.mrf.mxu0
  %v239 = vadd.f32 %v50, %v238
  %v240 = vpop.f32.mrf.mxu0
  %241 = vmatprep.mubr.bf16.mxu0 0
  %242 = vmatmul.mubr.bf16.gmra.mxu0 %v146
  %v243 = vpop.f32.mrf.mxu0
  %v244 = vadd.f32 %v50, %v243
  %v245 = vpop.f32.mrf.mxu0
  %v246 = vpop.f32.mrf.mxu0
  %v247 = vadd.f32 %v50, %v246
  %v248 = vpop.f32.mrf.mxu0
  %249 = vmatprep.mubr.bf16.mxu0 0
  %250 = vmatmul.mubr.bf16.gmra.mxu0 %v149
  %v251 = vpop.f32.mrf.mxu0
  %v252 = vadd.f32 %v50, %v251
  %v253 = vpop.f32.mrf.mxu0
  %v254 = vpop.f32.mrf.mxu0
  %v255 = vadd.f32 %v50, %v254
  %v256 = vpop.f32.mrf.mxu0
  %257 = vmatprep.mubr.bf16.mxu0 0
  %258 = vmatmul.mubr.bf16.gmra.mxu0 %v152
  %v259 = vpop.f32.mrf.mxu0
  %v260 = vadd.f32 %v50, %v259
  %v261 = vpop.f32.mrf.mxu0
  %v262 = vpop.f32.mrf.mxu0
  %v263 = vadd.f32 %v50, %v262
  %v264 = vpop.f32.mrf.mxu0
  %265 = vmatprep.mubr.bf16.mxu0 0
  %266 = vmatmul.mubr.bf16.gmra.mxu0 %v155
  %v267 = vpop.f32.mrf.mxu0
  %v268 = vadd.f32 %v50, %v267
  %v269 = vpop.f32.mrf.mxu0
  %v270 = vpop.f32.mrf.mxu0
  %v271 = vadd.f32 %v50, %v270
  %v272 = vpop.f32.mrf.mxu0
  %273 = vmatprep.mubr.bf16.mxu0 0
  %274 = vmatmul.mubr.bf16.gmra.mxu0 %v158
  %v275 = vpop.f32.mrf.mxu0
  %v276 = vadd.f32 %v50, %v275
  %v277 = vpop.f32.mrf.mxu0
  %v278 = vpop.f32.mrf.mxu0
  %v279 = vadd.f32 %v50, %v278
  %v280 = vpop.f32.mrf.mxu0
  %281 = vmatprep.mubr.bf16.mxu0 0
  %282 = vmatmul.mubr.bf16.gmra.mxu0 %v161
  %v283 = vpop.f32.mrf.mxu0
  %v284 = vadd.f32 %v50, %v283
  %v285 = vpop.f32.mrf.mxu0
  %v286 = vpop.f32.mrf.mxu0
  %v287 = vadd.f32 %v50, %v286
  %v288 = vpop.f32.mrf.mxu0
  %289 = vmatprep.mubr.bf16.mxu0 0
  %290 = vmatmul.mubr.bf16.gmra.mxu0 %v164
  %v291 = vpop.f32.mrf.mxu0
  %v292 = vadd.f32 %v50, %v291
  %v293 = vpop.f32.mrf.mxu0
  %v294 = vpop.f32.mrf.mxu0
  %v295 = vadd.f32 %v50, %v294
  %v296 = vpop.f32.mrf.mxu0
  %297 = vmatprep.mubr.bf16.mxu0 0
  %298 = vmatmul.mubr.bf16.gmra.mxu0 %v167
  %v299 = vpop.f32.mrf.mxu0
  %v300 = vadd.f32 %v50, %v299
  %v301 = vpop.f32.mrf.mxu0
  %v302 = vpop.f32.mrf.mxu0
  %v303 = vadd.f32 %v50, %v302
  %v304 = vpop.f32.mrf.mxu0
  %305 = vdwg.mxu0
  %306 = vst [vmem:[%s3] sm:$0xff] %v204
  %307 = vst [vmem:[%s3 + $0x8] sm:$0xff] %v207
  %308 = vst [vmem:[%s3 + $0x10] sm:$0xff] %v212
  %309 = vst [vmem:[%s3 + $0x18] sm:$0xff] %v215
  %310 = vst [vmem:[%s3 + $0x20] sm:$0xff] %v220
  %311 = vst [vmem:[%s3 + $0x28] sm:$0xff] %v223
  %312 = vst [vmem:[%s3 + $0x30] sm:$0xff] %v228
  %313 = vst [vmem:[%s3 + $0x38] sm:$0xff] %v231
  %314 = vst [vmem:[%s3 + $0x40] sm:$0xff] %v236
  %315 = vst [vmem:[%s3 + $0x48] sm:$0xff] %v239
  %316 = vst [vmem:[%s3 + $0x50] sm:$0xff] %v244
  %317 = vst [vmem:[%s3 + $0x58] sm:$0xff] %v247
  %318 = vst [vmem:[%s3 + $0x60] sm:$0xff] %v252
  %319 = vst [vmem:[%s3 + $0x68] sm:$0xff] %v255
  %320 = vst [vmem:[%s3 + $0x70] sm:$0xff] %v260
  %321 = vst [vmem:[%s3 + $0x78] sm:$0xff] %v263
  %322 = vst [vmem:[%s3 + $0x80] sm:$0xff] %v268
  %323 = vst [vmem:[%s3 + $0x88] sm:$0xff] %v271
  %324 = vst [vmem:[%s3 + $0x90] sm:$0xff] %v276
  %325 = vst [vmem:[%s3 + $0x98] sm:$0xff] %v279
  %326 = vst [vmem:[%s3 + $0xa0] sm:$0xff] %v284
  %327 = vst [vmem:[%s3 + $0xa8] sm:$0xff] %v287
  %328 = vst [vmem:[%s3 + $0xb0] sm:$0xff] %v292
  %329 = vst [vmem:[%s3 + $0xb8] sm:$0xff] %v295
  %330 = vst [vmem:[%s3 + $0xc0] sm:$0xff] %v300
  %331 = vst [vmem:[%s3 + $0xc8] sm:$0xff] %v303
  // Predicated region
  $region14: #{separate_linear.1} parent=0 // pred_check
    _
  $region15: #{separate_linear.1} parent=0 // pred_check_branch
    %333 = sbr.rel (0) target = $region17
  $region16: #{separate_linear.1} parent=0 // pred_region
    _
  $region17: #{separate_linear.1} parent=0 // pred_fallthru
    _
  // Predicated region
  $region18: #{separate_linear.1} parent=0 // pred_check
    _
  $region19: #{separate_linear.1} parent=0 // pred_check_branch
    %335 = sbr.rel (0) target = $region21
  $region20: #{separate_linear.1} parent=0 // pred_region
    _
  $region21: #{separate_linear.1} parent=0 // pred_fallthru
    _

</llo_original>
